<compile_context>
chip_gen: v7x
topology: tpu7x:2x2x1
jax: 0.10.0
libtpu: 0.0.40
codegen_flags: <defaults>
</compile_context>

<pallas_src>
import functools
import math

import jax
import jax.numpy as jnp
from jax.experimental import pallas as pl
from jax.experimental.pallas import tpu as pltpu

_EPS = 1e-8  # matches torch.nn.CosineSimilarity default eps


def _round_up(a, b):
    return (a + b - 1) // b * b


def _shrink_row_tile(t, width_elems, budget_bytes=2 << 20):
    """Halve the row tile until a (t, width) f32 block fits the VMEM budget (keeps t % 8 == 0)."""
    while t >= 16 and t % 16 == 0 and t * width_elems * 4 > budget_bytes:
        t //= 2
    return t


# ----------------------------------------------------------------------------- kernels


def _row_normalize_kernel(x_ref, o_ref, *, eps):
    x = x_ref[...].astype(jnp.float32)
    sq = jnp.sum(x * x, axis=-1, keepdims=True)
    inv = jax.lax.rsqrt(jnp.maximum(sq, eps * eps))  # clamp ||x|| at eps (PyTorch impl)
    o_ref[...] = (x * inv).astype(o_ref.dtype)


def _scaled_matmul_kernel(xn_ref, yn_ref, o_ref, acc_ref, *, inv_temp):
    @pl.when(pl.program_id(2) == 0)
    def _():
        acc_ref[...] = jnp.zeros_like(acc_ref)

    acc_ref[...] += jax.lax.dot_general(
        xn_ref[...], yn_ref[...],
        dimension_numbers=(((1,), (1,)), ((), ())),  # xn @ yn.T on the MXU
        preferred_element_type=jnp.float32,
    )

    @pl.when(pl.program_id(2) == pl.num_programs(2) - 1)
    def _():
        o_ref[...] = (acc_ref[...] * inv_temp).astype(o_ref.dtype)


def _rowwise_cosine_kernel(x_ref, y_ref, o_ref, *, inv_temp, eps):
    x = x_ref[...].astype(jnp.float32)
    y = y_ref[...].astype(jnp.float32)
    dot = jnp.sum(x * y, axis=-1, keepdims=True)
    nx2 = jnp.sum(x * x, axis=-1, keepdims=True)
    ny2 = jnp.sum(y * y, axis=-1, keepdims=True)
    denom2 = jnp.maximum(nx2 * ny2, eps * eps)  # == max(||x||*||y||, eps)^2
    o_ref[...] = (dot * jax.lax.rsqrt(denom2) * inv_temp).astype(o_ref.dtype)


# ----------------------------------------------------------------------------- pallas wrappers


def _row_normalize(x2d, eps, row_tile):
    R, Hp = x2d.shape
    return pl.pallas_call(
        functools.partial(_row_normalize_kernel, eps=eps),
        out_shape=jax.ShapeDtypeStruct((R, Hp), x2d.dtype),
        grid_spec=pltpu.PrefetchScalarGridSpec(
            num_scalar_prefetch=0,
            grid=(R // row_tile,),
            in_specs=[pl.BlockSpec((row_tile, Hp), lambda i: (i, 0))],
            out_specs=pl.BlockSpec((row_tile, Hp), lambda i: (i, 0)),
        ),
        compiler_params=pltpu.CompilerParams(dimension_semantics=("parallel",)),
    )(x2d)


def _cosine_sim_matmul(x2d, y2d, inv_temp, eps, out_dtype):
    M, H = x2d.shape
    N, _ = y2d.shape

    bk = min(_round_up(H, 128), 1024)
    H_pad = _round_up(H, bk)
    bm = min(256, _round_up(M, 8))
    bn = min(256, _round_up(N, 128))   # lane-dense output tiles (multiple of 128)
    M_pad = _round_up(M, bm)
    N_pad = _round_up(N, bn)

    # Zero padding is semantically inert: padded rows have norm 0 -> clamped to eps -> stay zero,
    # padded feature columns contribute nothing to dot products or norms.
    xp = jnp.pad(x2d, ((0, M_pad - M), (0, H_pad - H)))
    yp = jnp.pad(y2d, ((0, N_pad - N), (0, H_pad - H)))

    xn = _row_normalize(xp, eps, _shrink_row_tile(bm, H_pad))
    yn = _row_normalize(yp, eps, _shrink_row_tile(bn, H_pad))

    out = pl.pallas_call(
        functools.partial(_scaled_matmul_kernel, inv_temp=inv_temp),
        out_shape=jax.ShapeDtypeStruct((M_pad, N_pad), out_dtype),
        grid_spec=pltpu.PrefetchScalarGridSpec(
            num_scalar_prefetch=0,
            grid=(M_pad // bm, N_pad // bn, H_pad // bk),
            in_specs=[
                pl.BlockSpec((bm, bk), lambda i, j, k: (i, k)),
                pl.BlockSpec((bn, bk), lambda i, j, k: (j, k)),
            ],
            out_specs=pl.BlockSpec((bm, bn), lambda i, j, k: (i, j)),
            scratch_shapes=[pltpu.VMEM((bm, bn), jnp.float32)],
        ),
        compiler_params=pltpu.CompilerParams(
            dimension_semantics=("parallel", "parallel", "arbitrary")),
    )(xn, yn)
    return out[:M, :N]


def _cosine_sim_rowwise(xb, yb, inv_temp, eps, out_dtype):
    # xb, yb: (M, H) already broadcast to the common shape. This path is only taken when the
    # broadcast is NOT a pure outer product, so its size IS the natural output size (no blow-up).
    M, H = xb.shape
    bm = _shrink_row_tile(min(512, _round_up(M, 8)), H, budget_bytes=4 << 20)
    M_pad = _round_up(M, bm)
    xp = jnp.pad(xb, ((0, M_pad - M), (0, 0)))
    yp = jnp.pad(yb, ((0, M_pad - M), (0, 0)))
    out = pl.pallas_call(
        functools.partial(_rowwise_cosine_kernel, inv_temp=inv_temp, eps=eps),
        out_shape=jax.ShapeDtypeStruct((M_pad, 1), out_dtype),
        grid_spec=pltpu.PrefetchScalarGridSpec(
            num_scalar_prefetch=0,
            grid=(M_pad // bm,),
            in_specs=[
                pl.BlockSpec((bm, H), lambda i: (i, 0)),
                pl.BlockSpec((bm, H), lambda i: (i, 0)),
            ],
            out_specs=pl.BlockSpec((bm, 1), lambda i: (i, 0)),
        ),
        compiler_params=pltpu.CompilerParams(dimension_semantics=("parallel",)),
    )(xp, yp)
    # TODO(synk): pack the row-wise results into a lane-dense (M_pad//128, 128) slab to avoid
    # masked 1-lane stores; the hot outer-product path already emits lane-dense (bm, bn) tiles.
    return out[:M, 0]


# ----------------------------------------------------------------------------- public API


def similarity(x, y, temp, *, eps=_EPS):
    """Pallas equivalent of Similarity(temp)(x, y) == cosine_similarity(x, y, dim=-1) / temp."""
    out_shape = jnp.broadcast_shapes(x.shape, y.shape)
    H = out_shape[-1]
    lead = out_shape[:-1]
    inv_temp = 1.0 / float(temp)
    out_dtype = jnp.promote_types(x.dtype, y.dtype)

    r = len(out_shape)
    xs = (1,) * (r - x.ndim) + tuple(x.shape)
    ys = (1,) * (r - y.ndim) + tuple(y.shape)
    x_axes = [a for a in range(r - 1) if xs[a] > 1]
    y_axes = [a for a in range(r - 1) if ys[a] > 1]

    # Outer-product (GEMM) path: x and y vary on disjoint, non-interleaved leading axes and
    # neither broadcasts along the feature dim. Covers the canonical x:(B,1,H) vs y:(1,B,H).
    if xs[-1] == H and ys[-1] == H and not (set(x_axes) & set(y_axes)):
        if not x_axes or not y_axes or max(x_axes) < min(y_axes):
            a, a_axes, ashape, b, b_axes, bshape = x, x_axes, xs, y, y_axes, ys
            ok = True
        elif max(y_axes) < min(x_axes):
            # cosine is symmetric: put the operand whose axes come first on the M side
            a, a_axes, ashape, b, b_axes, bshape = y, y_axes, ys, x, x_axes, xs
            ok = True
        else:
            ok = False
        if ok:
            M = int(math.prod(ashape[i] for i in a_axes)) if a_axes else 1
            N = int(math.prod(bshape[i] for i in b_axes)) if b_axes else 1
            sim = _cosine_sim_matmul(a.reshape(M, H), b.reshape(N, H),
                                     inv_temp, eps, out_dtype)
            return sim.reshape(lead)

    # General fallback: row-wise reduction over the broadcast shape.
    Mrow = int(math.prod(lead)) if lead else 1
    xb = jnp.broadcast_to(x, out_shape).reshape(Mrow, H)
    yb = jnp.broadcast_to(y, out_shape).reshape(Mrow, H)
    return _cosine_sim_rowwise(xb, yb, inv_temp, eps, out_dtype).reshape(lead)


if __name__ == "__main__":
    key = jax.random.PRNGKey(0)
    kx, ky, kx2, ky2 = jax.random.split(key, 4)

    B, H = 8, 32
    temp = 0.05  # typical SimCSE temperature

    # Canonical usage: x (B, 1, H) vs y (1, B, H) -> (B, B) similarity matrix (MXU/GEMM path).
    x = jax.random.normal(kx, (B, 1, H), dtype=jnp.float32)
    y = jax.random.normal(ky, (1, B, H), dtype=jnp.float32)
    out = jax.block_until_ready(similarity(x, y, temp))

    xb = jnp.broadcast_to(x, (B, B, H))
    yb = jnp.broadcast_to(y, (B, B, H))
    dot = jnp.sum(xb * yb, axis=-1)
    denom = jnp.maximum(jnp.linalg.norm(xb, axis=-1) * jnp.linalg.norm(yb, axis=-1), _EPS)
    ref = dot / denom / temp
    assert out.shape == (B, B), out.shape
    assert jnp.allclose(out, ref, atol=1e-4, rtol=1e-4), "GEMM path mismatch vs reference"

    # Shared-axis usage (row-wise fallback path): x, y both (2, 4, H) -> (2, 4).
    x2 = jax.random.normal(kx2, (2, 4, H), dtype=jnp.float32)
    y2 = jax.random.normal(ky2, (2, 4, H), dtype=jnp.float32)
    out2 = jax.block_until_ready(similarity(x2, y2, temp))
    dot2 = jnp.sum(x2 * y2, axis=-1)
    denom2 = jnp.maximum(jnp.linalg.norm(x2, axis=-1) * jnp.linalg.norm(y2, axis=-1), _EPS)
    ref2 = dot2 / denom2 / temp
    assert out2.shape == (2, 4), out2.shape
    assert jnp.allclose(out2, ref2, atol=1e-4, rtol=1e-4), "row-wise path mismatch vs reference"

    print("KERNEL_OK")
</pallas_src>

<mosaic_0001>
module attributes {stable_mosaic.version = 11 : i64} {
  func.func @_row_normalize_kernel(%arg0: i32, %arg1: memref<8x128xf32, #tpu.memory_space<vmem>>, %arg2: memref<8x128xf32, #tpu.memory_space<vmem>>) attributes {dimension_semantics = [#tpu.dimension_semantics<parallel>], iteration_bounds = array<i64: 1>, scalar_prefetch = 0 : i64, scratch_operands = 0 : i64, tpu.core_type = #tpu.core_type<tc>, window_params = [{transform_indices = @transform_0, window_bounds = array<i64: 8, 128>}, {transform_indices = @transform_1, window_bounds = array<i64: 8, 128>}]} {
    %c0 = arith.constant 0 : index
    %c0_0 = arith.constant 0 : index
    %0 = vector.load %arg1[%c0, %c0_0] : memref<8x128xf32, #tpu.memory_space<vmem>>, vector<8x128xf32>
    %1 = arith.mulf %0, %0 : vector<8x128xf32>
    %cst = arith.constant dense<0.000000e+00> : vector<8xf32>
    %2 = vector.multi_reduction <add>, %1, %cst [1] : vector<8x128xf32> to vector<8xf32>
    %3 = vector.shape_cast %2 : vector<8xf32> to vector<8x1xf32>
    %cst_1 = arith.constant 1.000000e-16 : f32
    %4 = vector.broadcast %cst_1 : f32 to vector<8x1xf32>
    %5 = arith.maximumf %3, %4 : vector<8x1xf32>
    %6 = math.rsqrt %5 : vector<8x1xf32>
    %7 = vector.broadcast %6 : vector<8x1xf32> to vector<8x128xf32>
    %8 = arith.mulf %0, %7 : vector<8x128xf32>
    %c0_2 = arith.constant 0 : index
    %c0_3 = arith.constant 0 : index
    %9 = vector.load %arg2[%c0_2, %c0_3] : memref<8x128xf32, #tpu.memory_space<vmem>>, vector<8x128xf32>
    tpu.vector_store %arg2[%c0_2, %c0_3], %8 {strides = array<i32>} : memref<8x128xf32, #tpu.memory_space<vmem>>, vector<8x128xf32>,
    return
  }
  func.func @transform_0(%arg0: i32) -> (i32, i32) {
    %c0_i32 = arith.constant 0 : i32
    %c0_i32_0 = arith.constant 0 : i32
    return %arg0, %c0_i32 : i32, i32
  }
  func.func @transform_1(%arg0: i32) -> (i32, i32) {
    %c0_i32 = arith.constant 0 : i32
    %c0_i32_0 = arith.constant 0 : i32
    return %arg0, %c0_i32 : i32, i32
  }
}

</mosaic_0001>

<llo_original>
// kernel: tpu_custom_call.1
$region0: #{tpu_custom_call.1}
  #allocation0 [shape = 'u32[]', space=smem, size = 0x4, offset = 0x4, fixed_abs, tag = 'smem constant byte address 0x4 - core index']
  #allocation1 [shape = 'u32[144,128]{1,0:T(1,128)}', space=vmem, size = 0x12000, scoped, tag = 'internal scratch']
  %s0 = inlined_call_operand.hbm [shape: f32[8,128], index: 0, kind: input, shape index: {}]
  %s1 = inlined_call_operand.hbm [shape: f32[8,128], index: 1, kind: output, shape index: {}]
  %s2 = sld [smem:[#allocation0]]
  $region18: #{tpu_custom_call.1} parent=0
    _
  %s4 = ssub.s32 1, %s2
  %s5 = scalar_select 0, %s4, %s2
  $region1: #{tpu_custom_call.1} parent=0
    #allocation2 [shape = 'u8[4096]{0}', space=vmem, size = 0x1000, scoped, tag = 'input window, operand 0, single buffered']
    #allocation3 [shape = 's32[1]{0}', space=sflag, size = 0x4, scoped, tag = 'scoped memory for tpu_custom_call.1']
    #allocation4 [shape = 's32[1]{0}', space=sflag, size = 0x4, scoped, tag = 'scoped memory for tpu_custom_call.1']
    #allocation5 [shape = 'u8[4096]{0}', space=vmem, size = 0x1000, scoped, tag = 'output window, operand 0, single buffered']
    %6 = vsyncpa [#allocation3], 0
    %7 = vsyncpa [#allocation4], 0
    // Predicated region
    $region2: #{tpu_custom_call.1} parent=1 // pred_check
      _
    $region3: #{tpu_custom_call.1} parent=1 // pred_check_branch
      %9 = sbr.rel (0) target = $region5
    $region4: #{tpu_custom_call.1} parent=1 // pred_region
      %s11 = ssub.s32 128, 128
      %12 = vsyncadd [#allocation3], %s11
      %s14 = sshll.u32 [#allocation2], 4
      %s15 = int_to_ptr.vmem [resolvable:$true] %s14
      %17 = dma.hbm_to_vmem [thread:$0]  %s0, 128, %s15, [#allocation3]
    $region5: #{tpu_custom_call.1} parent=1 // pred_fallthru
      _
    // Predicated region
    $region6: #{tpu_custom_call.1} parent=1 // pred_check
      _
    $region7: #{tpu_custom_call.1} parent=1 // pred_check_branch
      %19 = sbr.rel (0) target = $region9
    $region8: #{tpu_custom_call.1} parent=1 // pred_region
      %20 = dma.done [#allocation3], 128
    $region9: #{tpu_custom_call.1} parent=1 // pred_fallthru
      _
    %v21 = vld [vmem:[#allocation2] sm:$0xff]
    %v22 = vmul.f32 %v21, %v21
    %23 = vadd.xlane.f32.xlu0 %v22
    %v24 = vpop.xlane.xlu0 %23
    %v25 = vmax.f32 %v24, 1e-16
    %v26 = vrsqrt.pop %v25
    %v27 = vmul.f32 %v21, %v26
    %28 = vst [vmem:[#allocation5] sm:$0xff] %v27
    // Predicated region
    $region10: #{tpu_custom_call.1} parent=1 // pred_check
      _
    $region11: #{tpu_custom_call.1} parent=1 // pred_check_branch
      %30 = sbr.rel (0) target = $region13
    $region12: #{tpu_custom_call.1} parent=1 // pred_region
      %s32 = ssub.s32 128, 128
      %33 = vsyncadd [#allocation4], %s32
      %s35 = sshll.u32 [#allocation5], 4
      %s36 = int_to_ptr.vmem [resolvable:$true] %s35
      %38 = dma.vmem_to_hbm [thread:$0]  %s36, 128, %s1, [#allocation4]
    $region13: #{tpu_custom_call.1} parent=1 // pred_fallthru
      _
    // Predicated region
    $region14: #{tpu_custom_call.1} parent=1 // pred_check
      _
    $region15: #{tpu_custom_call.1} parent=1 // pred_check_branch
      %40 = sbr.rel (0) target = $region17
    $region16: #{tpu_custom_call.1} parent=1 // pred_region
      %41 = dma.done [#allocation4], 128
    $region17: #{tpu_custom_call.1} parent=1 // pred_fallthru
      _
    %42 = vsyncpa [#allocation3], 1
    %43 = vsyncpa [#allocation4], 1

</llo_original>
